<compile_context>
chip_gen: v7x
topology: tpu7x:2x2x1
jax: 0.10.0
libtpu: 0.0.40
codegen_flags: <defaults>
</compile_context>

<pallas_src>
import functools

import jax
import jax.numpy as jnp
from jax.experimental import pallas as pl
from jax.experimental.pallas import tpu as pltpu

DELTA = 0.2
LANE = 128
MAX_TILE_ROWS = 4096  # 4096 x 128 x f32 = 2 MiB per input tile; safe on v5e/v6e/v7x


def _huber_partial_kernel(pred_ref, gt_ref, out_ref, *, rows, tile_rows, need_mask):
    """One grid step: Huber(pred, gt) over a (tile_rows, 128) slab -> (8, 128) partial sum."""
    diff = pred_ref[...].astype(jnp.float32) - gt_ref[...].astype(jnp.float32)
    adiff = jnp.abs(diff)
    per_elem = jnp.where(
        adiff <= DELTA,
        0.5 * diff * diff,
        DELTA * (adiff - 0.5 * DELTA),
    )
    if need_mask:
        # Last grid block overhangs the (rows, 128) slab: Pallas pads it with
        # unspecified values.  Mask the Huber term (not just one operand) so
        # garbage/NaN never reaches the accumulation.
        i = pl.program_id(0)
        row_ids = i * tile_rows + jax.lax.broadcasted_iota(
            jnp.int32, (tile_rows, LANE), 0
        )
        per_elem = jnp.where(row_ids < rows, per_elem, 0.0)
    # Pure-VPU reduction to an (8, 128) vreg-shaped partial; no XLU / SMEM round-trip.
    out_ref[...] = per_elem.reshape(tile_rows // 8, 8, LANE).sum(axis=0)


def _nearest_resize_nchw(gt, out_h, out_w):
    """PyTorch F.interpolate(mode='nearest'): src_idx = floor(dst_idx * in/out)."""
    gh, gw = gt.shape[-2], gt.shape[-1]
    h_idx = (jnp.arange(out_h, dtype=jnp.int32) * gh) // out_h
    w_idx = (jnp.arange(out_w, dtype=jnp.int32) * gw) // out_w
    h_idx = jnp.minimum(h_idx, gh - 1)
    w_idx = jnp.minimum(w_idx, gw - 1)
    return gt[:, :, h_idx, :][:, :, :, w_idx]


def edge_loss_pallas(pred, gt):
    n, c, h, w = pred.shape
    # Nearest resize of gt to pred's spatial size, kept in gt's native dtype
    # (nearest selection commutes with the float cast; cast happens in-kernel).
    gt_r = _nearest_resize_nchw(gt, h, w)

    total = n * c * h * w

    rows = pl.cdiv(total, LANE)
    rows = max(rows, 8)                 # keep block second-to-last dim >= 8
    padded_total = rows * LANE
    pad = padded_total - total

    pred_flat = pred.reshape(-1)
    gt_flat = gt_r.reshape(-1)
    if pad:                             # only when total % 128 != 0 (rare, tiny pad)
        pred_flat = jnp.pad(pred_flat, (0, pad))
        gt_flat = jnp.pad(gt_flat, (0, pad))
    pred_2d = pred_flat.reshape(rows, LANE)   # free view of contiguous NCHW data
    gt_2d = gt_flat.reshape(rows, LANE)

    tile_rows = min(MAX_TILE_ROWS, (rows // 8) * 8)   # multiple of 8, <= rows
    nblocks = pl.cdiv(rows, tile_rows)
    need_mask = (rows % tile_rows) != 0

    kernel = functools.partial(
        _huber_partial_kernel, rows=rows, tile_rows=tile_rows, need_mask=need_mask
    )

    bytes_accessed = (
        pred_2d.size * pred_2d.dtype.itemsize
        + gt_2d.size * gt_2d.dtype.itemsize
        + nblocks * 8 * LANE * 4
    )

    partials = pl.pallas_call(
        kernel,
        out_shape=jax.ShapeDtypeStruct((nblocks * 8, LANE), jnp.float32),
        grid_spec=pltpu.PrefetchScalarGridSpec(
            num_scalar_prefetch=0,
            grid=(nblocks,),
            in_specs=[
                pl.BlockSpec((tile_rows, LANE), lambda i: (i, 0)),
                pl.BlockSpec((tile_rows, LANE), lambda i: (i, 0)),
            ],
            out_specs=pl.BlockSpec((8, LANE), lambda i: (i, 0)),
        ),
        compiler_params=pltpu.CompilerParams(
            dimension_semantics=("parallel",),          # independent blocks; both TCs on v7x
            vmem_limit_bytes=32 * 1024 * 1024,          # 2 in x 2 bufs x 2 MiB fits with headroom
        ),
        cost_estimate=pl.CostEstimate(
            flops=6 * total, transcendentals=0, bytes_accessed=bytes_accessed
        ),
    )(pred_2d, gt_2d)

    # Tiny final reduce + mean scale in JAX (negligible vs the streaming reads).
    return jnp.sum(partials) / jnp.float32(total)


def edge_loss_ref(pred, gt):
    """Pure-JAX reference for validation."""
    pred = pred.astype(jnp.float32)
    gt_r = _nearest_resize_nchw(gt, pred.shape[-2], pred.shape[-1]).astype(jnp.float32)
    diff = pred - gt_r
    adiff = jnp.abs(diff)
    per = jnp.where(adiff <= DELTA, 0.5 * diff * diff, DELTA * (adiff - 0.5 * DELTA))
    return jnp.mean(per)


if __name__ == "__main__":
    key = jax.random.PRNGKey(0)
    k1, k2 = jax.random.split(key)
    # pred: NCHW prediction at full resolution; gt: NCHW ground truth at half resolution.
    pred = jax.random.normal(k1, (2, 4, 16, 16), dtype=jnp.float32)
    gt = jax.random.normal(k2, (2, 4, 8, 8), dtype=jnp.float32)

    loss = edge_loss_pallas(pred, gt)
    jax.block_until_ready(loss)

    ref = edge_loss_ref(pred, gt)
    assert jnp.allclose(loss, ref, rtol=1e-5, atol=1e-6), (loss, ref)
    print("KERNEL_OK")
</pallas_src>

<mosaic_0001>
module attributes {stable_mosaic.version = 11 : i64} {
  func.func @_huber_partial_kernel(%arg0: i32, %arg1: memref<16x128xf32, #tpu.memory_space<vmem>>, %arg2: memref<16x128xf32, #tpu.memory_space<vmem>>, %arg3: memref<8x128xf32, #tpu.memory_space<vmem>>) attributes {dimension_semantics = [#tpu.dimension_semantics<parallel>], iteration_bounds = array<i64: 1>, scalar_prefetch = 0 : i64, scratch_operands = 0 : i64, tpu.core_type = #tpu.core_type<tc>, window_params = [{transform_indices = @transform_0, window_bounds = array<i64: 16, 128>}, {transform_indices = @transform_1, window_bounds = array<i64: 16, 128>}, {transform_indices = @transform_2, window_bounds = array<i64: 8, 128>}]} {
    %c0 = arith.constant 0 : index
    %c0_0 = arith.constant 0 : index
    %0 = vector.load %arg1[%c0, %c0_0] : memref<16x128xf32, #tpu.memory_space<vmem>>, vector<16x128xf32>
    %c0_1 = arith.constant 0 : index
    %c0_2 = arith.constant 0 : index
    %1 = vector.load %arg2[%c0_1, %c0_2] : memref<16x128xf32, #tpu.memory_space<vmem>>, vector<16x128xf32>
    %2 = arith.subf %0, %1 : vector<16x128xf32>
    %3 = math.absf %2 : vector<16x128xf32>
    %cst = arith.constant 2.000000e-01 : f32
    %4 = vector.broadcast %cst : f32 to vector<16x128xf32>
    %5 = arith.cmpf ole, %3, %4 : vector<16x128xf32>
    %cst_3 = arith.constant 5.000000e-01 : f32
    %6 = vector.broadcast %cst_3 : f32 to vector<16x128xf32>
    %7 = arith.mulf %6, %2 : vector<16x128xf32>
    %8 = arith.mulf %7, %2 : vector<16x128xf32>
    %cst_4 = arith.constant 1.000000e-01 : f32
    %9 = vector.broadcast %cst_4 : f32 to vector<16x128xf32>
    %10 = arith.subf %3, %9 : vector<16x128xf32>
    %cst_5 = arith.constant 2.000000e-01 : f32
    %11 = vector.broadcast %cst_5 : f32 to vector<16x128xf32>
    %12 = arith.mulf %11, %10 : vector<16x128xf32>
    %13 = arith.select %5, %8, %12 : vector<16x128xi1>, vector<16x128xf32>
    %14 = vector.shape_cast %13 : vector<16x128xf32> to vector<2x8x128xf32>
    %cst_6 = arith.constant dense<0.000000e+00> : vector<8x128xf32>
    %15 = vector.multi_reduction <add>, %14, %cst_6 [0] : vector<2x8x128xf32> to vector<8x128xf32>
    %c0_7 = arith.constant 0 : index
    %c0_8 = arith.constant 0 : index
    %16 = vector.load %arg3[%c0_7, %c0_8] : memref<8x128xf32, #tpu.memory_space<vmem>>, vector<8x128xf32>
    tpu.vector_store %arg3[%c0_7, %c0_8], %15 {strides = array<i32>} : memref<8x128xf32, #tpu.memory_space<vmem>>, vector<8x128xf32>,
    return
  }
  func.func @transform_0(%arg0: i32) -> (i32, i32) {
    %c0_i32 = arith.constant 0 : i32
    %c0_i32_0 = arith.constant 0 : i32
    return %arg0, %c0_i32 : i32, i32
  }
  func.func @transform_1(%arg0: i32) -> (i32, i32) {
    %c0_i32 = arith.constant 0 : i32
    %c0_i32_0 = arith.constant 0 : i32
    return %arg0, %c0_i32 : i32, i32
  }
  func.func @transform_2(%arg0: i32) -> (i32, i32) {
    %c0_i32 = arith.constant 0 : i32
    %c0_i32_0 = arith.constant 0 : i32
    return %arg0, %c0_i32 : i32, i32
  }
}

</mosaic_0001>

<llo_original>
// kernel: tpu_custom_call.1
$region0: #{tpu_custom_call.1}
  #allocation0 [shape = 'u32[]', space=smem, size = 0x4, offset = 0x4, fixed_abs, tag = 'smem constant byte address 0x4 - core index']
  #allocation1 [shape = 'u32[144,128]{1,0:T(1,128)}', space=vmem, size = 0x12000, scoped, tag = 'internal scratch']
  %s0 = inlined_call_operand.hbm [shape: f32[16,128], index: 0, kind: input, shape index: {}]
  %s1 = inlined_call_operand.hbm [shape: f32[16,128], index: 1, kind: input, shape index: {}]
  %s2 = inlined_call_operand.hbm [shape: f32[8,128], index: 2, kind: output, shape index: {}]
  %s3 = sld [smem:[#allocation0]]
  $region26: #{tpu_custom_call.1} parent=0
    _
  %s5 = ssub.s32 1, %s3
  %s6 = scalar_select 0, %s5, %s3
  $region1: #{tpu_custom_call.1} parent=0
    #allocation2 [shape = 'u8[8192]{0}', space=vmem, size = 0x2000, scoped, tag = 'input window, operand 0, single buffered']
    #allocation3 [shape = 's32[1]{0}', space=sflag, size = 0x4, scoped, tag = 'scoped memory for tpu_custom_call.1']
    #allocation4 [shape = 's32[1]{0}', space=sflag, size = 0x4, scoped, tag = 'scoped memory for tpu_custom_call.1']
    #allocation5 [shape = 'u8[8192]{0}', space=vmem, size = 0x2000, scoped, tag = 'input window, operand 1, single buffered']
    #allocation6 [shape = 's32[1]{0}', space=sflag, size = 0x4, scoped, tag = 'scoped memory for tpu_custom_call.1']
    #allocation7 [shape = 'u8[4096]{0}', space=vmem, size = 0x1000, scoped, tag = 'output window, operand 0, single buffered']
    %7 = vsyncpa [#allocation3], 0
    %8 = vsyncpa [#allocation6], 0
    %9 = vsyncpa [#allocation4], 0
    // Predicated region
    $region2: #{tpu_custom_call.1} parent=1 // pred_check
      _
    $region3: #{tpu_custom_call.1} parent=1 // pred_check_branch
      %11 = sbr.rel (0) target = $region5
    $region4: #{tpu_custom_call.1} parent=1 // pred_region
      %s13 = ssub.s32 256, 256
      %14 = vsyncadd [#allocation3], %s13
      %s15 = sshll.u32 [#allocation2], 4
      %s16 = int_to_ptr.vmem [resolvable:$true] %s15
      %21 = dma.hbm_to_vmem [thread:$0]  %s0, 256, %s16, [#allocation3], 128, 128, 8
    $region5: #{tpu_custom_call.1} parent=1 // pred_fallthru
      _
    // Predicated region
    $region6: #{tpu_custom_call.1} parent=1 // pred_check
      _
    $region7: #{tpu_custom_call.1} parent=1 // pred_check_branch
      %23 = sbr.rel (0) target = $region9
    $region8: #{tpu_custom_call.1} parent=1 // pred_region
      %s25 = ssub.s32 256, 256
      %26 = vsyncadd [#allocation6], %s25
      %s27 = sshll.u32 [#allocation5], 4
      %s28 = int_to_ptr.vmem [resolvable:$true] %s27
      %33 = dma.hbm_to_vmem [thread:$0]  %s1, 256, %s28, [#allocation6], 128, 128, 8
    $region9: #{tpu_custom_call.1} parent=1 // pred_fallthru
      _
    // Predicated region
    $region10: #{tpu_custom_call.1} parent=1 // pred_check
      _
    $region11: #{tpu_custom_call.1} parent=1 // pred_check_branch
      %35 = sbr.rel (0) target = $region13
    $region12: #{tpu_custom_call.1} parent=1 // pred_region
      %36 = dma.done [#allocation3], 256
    $region13: #{tpu_custom_call.1} parent=1 // pred_fallthru
      _
    // Predicated region
    $region14: #{tpu_custom_call.1} parent=1 // pred_check
      _
    $region15: #{tpu_custom_call.1} parent=1 // pred_check_branch
      %38 = sbr.rel (0) target = $region17
    $region16: #{tpu_custom_call.1} parent=1 // pred_region
      %39 = dma.done [#allocation6], 256
    $region17: #{tpu_custom_call.1} parent=1 // pred_fallthru
      _
    %v40 = vld [vmem:[#allocation2] sm:$0xff]
    %v41 = vld [vmem:[#allocation2 + $0x8] sm:$0xff]
    %v42 = vld [vmem:[#allocation5] sm:$0xff]
    %v43 = vld [vmem:[#allocation5 + $0x8] sm:$0xff]
    %v44 = vsub.f32 %v40, %v42
    %v45 = vsub.f32 %v41, %v43
    %v46 = vand.u32 2147483647, %v44
    %v47 = vand.u32 2147483647, %v45
    %vm48 = vcmp.le.f32.partialorder %v46, 0.2
    %vm49 = vcmp.le.f32.partialorder %v47, 0.2
    %v50 = vmul.f32 %v44, 0.5
    %v51 = vmul.f32 %v45, 0.5
    %v52 = vmul.f32 %v50, %v44
    %v53 = vmul.f32 %v51, %v45
    %v54 = vsub.f32 %v46, 0.1
    %v55 = vsub.f32 %v47, 0.1
    %v56 = vmul.f32 %v54, 0.2
    %v57 = vmul.f32 %v55, 0.2
    %v58 = vsel %vm48, %v52, %v56
    %v59 = vsel %vm49, %v53, %v57
    %v60 = vadd.f32 %v58, %v59
    %61 = vst [vmem:[#allocation7] sm:$0xff] %v60
    // Predicated region
    $region18: #{tpu_custom_call.1} parent=1 // pred_check
      _
    $region19: #{tpu_custom_call.1} parent=1 // pred_check_branch
      %63 = sbr.rel (0) target = $region21
    $region20: #{tpu_custom_call.1} parent=1 // pred_region
      %s65 = ssub.s32 128, 128
      %66 = vsyncadd [#allocation4], %s65
      %s68 = sshll.u32 [#allocation7], 4
      %s69 = int_to_ptr.vmem [resolvable:$true] %s68
      %71 = dma.vmem_to_hbm [thread:$0]  %s69, 128, %s2, [#allocation4]
    $region21: #{tpu_custom_call.1} parent=1 // pred_fallthru
      _
    // Predicated region
    $region22: #{tpu_custom_call.1} parent=1 // pred_check
      _
    $region23: #{tpu_custom_call.1} parent=1 // pred_check_branch
      %73 = sbr.rel (0) target = $region25
    $region24: #{tpu_custom_call.1} parent=1 // pred_region
      %74 = dma.done [#allocation4], 128
    $region25: #{tpu_custom_call.1} parent=1 // pred_fallthru
      _
    %75 = vsyncpa [#allocation3], 1
    %76 = vsyncpa [#allocation6], 1
    %77 = vsyncpa [#allocation4], 1

</llo_original>
